<compile_context>
chip_gen: v7x
topology: tpu7x:2x2x1
jax: 0.10.0
libtpu: 0.0.40
codegen_flags: <defaults>
</compile_context>

<pallas_src>
import jax
import jax.numpy as jnp
from jax.experimental import pallas as pl
from jax.experimental.pallas import tpu as pltpu


def _round_up(x, m):
    return ((x + m - 1) // m) * m


def toy_mlp_kernel(xT_ref, w1_ref, b1_ref, w2_ref, b2_ref, oT_ref):
    # Transposed layout: features on sublanes, batch on lanes.
    xT = xT_ref[...]                                                       # (10, TB)
    h = jnp.dot(w1_ref[...], xT, preferred_element_type=jnp.float32)       # (10, TB)
    h = jnp.maximum(h + b1_ref[...], 0.0)                                  # bias + ReLU
    y = jnp.dot(w2_ref[...], h, preferred_element_type=jnp.float32)        # (5, TB)
    oT_ref[...] = (y + b2_ref[...]).astype(oT_ref.dtype)                   # lane-dense store


def toy_model_forward(x, w1, b1, w2, b2, *, block_b=2048):
    """ToyModel forward: relu(x @ w1.T + b1) @ w2.T + b2 (PyTorch nn.Linear semantics).

    x:  (B, 10) f32
    w1: (10, 10) [out, in]   b1: (10,)
    w2: (5, 10)  [out, in]   b2: (5,)
    """
    B, f_in = x.shape
    f_hid = w1.shape[0]
    f_out = w2.shape[0]

    # Lane-dense batch tile: multiple of 128 lanes, capped at `block_b`.
    tb = min(block_b, _round_up(B, 128))
    bp = _round_up(B, tb)

    # Batch onto lanes; zero-pad to a whole number of tiles (padded cols sliced off).
    xT = jnp.pad(x.T, ((0, 0), (0, bp - B)))                               # (10, Bp)
    b1c = b1.reshape(f_hid, 1)                                             # column biases
    b2c = b2.reshape(f_out, 1)

    out_T = pl.pallas_call(
        toy_mlp_kernel,
        out_shape=jax.ShapeDtypeStruct((f_out, bp), jnp.float32),
        grid_spec=pltpu.PrefetchScalarGridSpec(
            num_scalar_prefetch=0,
            grid=(bp // tb,),
            in_specs=[
                pl.BlockSpec((f_in, tb), lambda i: (0, i)),      # x tile — pipelined
                pl.BlockSpec((f_hid, f_in), lambda i: (0, 0)),   # w1 — VMEM-resident
                pl.BlockSpec((f_hid, 1), lambda i: (0, 0)),      # b1 — VMEM-resident
                pl.BlockSpec((f_out, f_hid), lambda i: (0, 0)),  # w2 — VMEM-resident
                pl.BlockSpec((f_out, 1), lambda i: (0, 0)),      # b2 — VMEM-resident
            ],
            out_specs=pl.BlockSpec((f_out, tb), lambda i: (0, i)),
        ),
        compiler_params=pltpu.CompilerParams(
            dimension_semantics=("parallel",),  # shards batch tiles across v7x's 2 TCs
        ),
    )(xT, w1, b1c, w2, b2c)

    return out_T[:, :B].T                                                  # (B, 5)


def init_params(key):
    """Deterministic init mimicking PyTorch nn.Linear default (uniform +/- 1/sqrt(fan_in)).

    Weights are kept in PyTorch's (out_features, in_features) layout.
    """
    k1, k2, k3, k4 = jax.random.split(key, 4)
    bound = 1.0 / jnp.sqrt(10.0)
    w1 = jax.random.uniform(k1, (10, 10), jnp.float32, -bound, bound)  # net1: (out=10, in=10)
    b1 = jax.random.uniform(k2, (10,), jnp.float32, -bound, bound)
    w2 = jax.random.uniform(k3, (5, 10), jnp.float32, -bound, bound)   # net2: (out=5, in=10)
    b2 = jax.random.uniform(k4, (5,), jnp.float32, -bound, bound)
    return w1, b1, w2, b2


if __name__ == "__main__":
    key = jax.random.PRNGKey(0)
    kx, kp = jax.random.split(key)
    w1, b1, w2, b2 = init_params(kp)

    def ref_fwd(xx):  # plain-JAX reference (same math as the PyTorch module)
        h = jnp.maximum(
            jnp.dot(xx, w1.T, precision=jax.lax.Precision.HIGHEST) + b1, 0.0)
        return jnp.dot(h, w2.T, precision=jax.lax.Precision.HIGHEST) + b2

    # Small batch (typical ToyModel usage).
    B = 8
    x = jax.random.normal(kx, (B, 10), jnp.float32)
    out = jax.block_until_ready(toy_model_forward(x, w1, b1, w2, b2))
    assert out.shape == (B, 5)
    assert jnp.allclose(out, ref_fwd(x), atol=1e-5, rtol=1e-5)

    # Exercise the multi-tile, padded-batch pipeline path (grid > 1).
    B2 = 300
    x2 = jax.random.normal(kx, (B2, 10), jnp.float32)
    out2 = jax.block_until_ready(toy_model_forward(x2, w1, b1, w2, b2, block_b=128))
    assert out2.shape == (B2, 5)
    assert jnp.allclose(out2, ref_fwd(x2), atol=1e-5, rtol=1e-5)

    print("KERNEL_OK")
</pallas_src>

<mosaic_0001>
module attributes {stable_mosaic.version = 11 : i64} {
  func.func @toy_mlp_kernel(%arg0: i32, %arg1: memref<10x128xf32, #tpu.memory_space<vmem>>, %arg2: memref<10x10xf32, #tpu.memory_space<vmem>>, %arg3: memref<10x1xf32, #tpu.memory_space<vmem>>, %arg4: memref<5x10xf32, #tpu.memory_space<vmem>>, %arg5: memref<5x1xf32, #tpu.memory_space<vmem>>, %arg6: memref<5x128xf32, #tpu.memory_space<vmem>>) attributes {dimension_semantics = [#tpu.dimension_semantics<parallel>], iteration_bounds = array<i64: 1>, scalar_prefetch = 0 : i64, scratch_operands = 0 : i64, tpu.core_type = #tpu.core_type<tc>, window_params = [{transform_indices = @transform_0, window_bounds = array<i64: 10, 128>}, {pipeline_mode = #tpu.pipeline_mode<synchronous>, transform_indices = @transform_1, window_bounds = array<i64: 10, 10>}, {pipeline_mode = #tpu.pipeline_mode<synchronous>, transform_indices = @transform_2, window_bounds = array<i64: 10, 1>}, {pipeline_mode = #tpu.pipeline_mode<synchronous>, transform_indices = @transform_3, window_bounds = array<i64: 5, 10>}, {pipeline_mode = #tpu.pipeline_mode<synchronous>, transform_indices = @transform_4, window_bounds = array<i64: 5, 1>}, {transform_indices = @transform_5, window_bounds = array<i64: 5, 128>}]} {
    %c0 = arith.constant 0 : index
    %c0_0 = arith.constant 0 : index
    %0 = vector.load %arg1[%c0, %c0_0] : memref<10x128xf32, #tpu.memory_space<vmem>>, vector<10x128xf32>
    %c0_1 = arith.constant 0 : index
    %c0_2 = arith.constant 0 : index
    %1 = vector.load %arg2[%c0_1, %c0_2] : memref<10x10xf32, #tpu.memory_space<vmem>>, vector<10x10xf32>
    %cst = arith.constant dense<0.000000e+00> : vector<10x128xf32>
    %2 = tpu.matmul %1, %0, %cst {dimension_numbers = #tpu.dot_dimension_numbers<[1], [0], [0], [1], [0, 0, 1, 1], [], []>} : vector<10x10xf32>, vector<10x128xf32>, vector<10x128xf32> -> vector<10x128xf32>
    %c0_3 = arith.constant 0 : index
    %c0_4 = arith.constant 0 : index
    %3 = vector.load %arg3[%c0_3, %c0_4] : memref<10x1xf32, #tpu.memory_space<vmem>>, vector<10x1xf32>
    %4 = vector.broadcast %3 : vector<10x1xf32> to vector<10x128xf32>
    %5 = arith.addf %2, %4 : vector<10x128xf32>
    %cst_5 = arith.constant 0.000000e+00 : f32
    %6 = vector.broadcast %cst_5 : f32 to vector<10x128xf32>
    %7 = arith.maximumf %5, %6 : vector<10x128xf32>
    %c0_6 = arith.constant 0 : index
    %c0_7 = arith.constant 0 : index
    %8 = vector.load %arg4[%c0_6, %c0_7] : memref<5x10xf32, #tpu.memory_space<vmem>>, vector<5x10xf32>
    %cst_8 = arith.constant dense<0.000000e+00> : vector<5x128xf32>
    %9 = tpu.matmul %8, %7, %cst_8 {dimension_numbers = #tpu.dot_dimension_numbers<[1], [0], [0], [1], [0, 0, 1, 1], [], []>} : vector<5x10xf32>, vector<10x128xf32>, vector<5x128xf32> -> vector<5x128xf32>
    %c0_9 = arith.constant 0 : index
    %c0_10 = arith.constant 0 : index
    %10 = vector.load %arg5[%c0_9, %c0_10] : memref<5x1xf32, #tpu.memory_space<vmem>>, vector<5x1xf32>
    %11 = vector.broadcast %10 : vector<5x1xf32> to vector<5x128xf32>
    %12 = arith.addf %9, %11 : vector<5x128xf32>
    %c0_11 = arith.constant 0 : index
    %c0_12 = arith.constant 0 : index
    %13 = vector.load %arg6[%c0_11, %c0_12] : memref<5x128xf32, #tpu.memory_space<vmem>>, vector<5x128xf32>
    tpu.vector_store %arg6[%c0_11, %c0_12], %12 {strides = array<i32>} : memref<5x128xf32, #tpu.memory_space<vmem>>, vector<5x128xf32>,
    return
  }
  func.func @transform_0(%arg0: i32) -> (i32, i32) {
    %c0_i32 = arith.constant 0 : i32
    %c0_i32_0 = arith.constant 0 : i32
    return %c0_i32, %arg0 : i32, i32
  }
  func.func @transform_1(%arg0: i32) -> (i32, i32) {
    %c0_i32 = arith.constant 0 : i32
    %c0_i32_0 = arith.constant 0 : i32
    %c0_i32_1 = arith.constant 0 : i32
    return %c0_i32, %c0_i32_0 : i32, i32
  }
  func.func @transform_2(%arg0: i32) -> (i32, i32) {
    %c0_i32 = arith.constant 0 : i32
    %c0_i32_0 = arith.constant 0 : i32
    %c0_i32_1 = arith.constant 0 : i32
    return %c0_i32, %c0_i32_0 : i32, i32
  }
  func.func @transform_3(%arg0: i32) -> (i32, i32) {
    %c0_i32 = arith.constant 0 : i32
    %c0_i32_0 = arith.constant 0 : i32
    %c0_i32_1 = arith.constant 0 : i32
    return %c0_i32, %c0_i32_0 : i32, i32
  }
  func.func @transform_4(%arg0: i32) -> (i32, i32) {
    %c0_i32 = arith.constant 0 : i32
    %c0_i32_0 = arith.constant 0 : i32
    %c0_i32_1 = arith.constant 0 : i32
    return %c0_i32, %c0_i32_0 : i32, i32
  }
  func.func @transform_5(%arg0: i32) -> (i32, i32) {
    %c0_i32 = arith.constant 0 : i32
    %c0_i32_0 = arith.constant 0 : i32
    return %c0_i32, %arg0 : i32, i32
  }
}

</mosaic_0001>

<llo_original>
// kernel: tpu_custom_call.1
$region0: #{tpu_custom_call.1}
  #allocation0 [shape = 'u32[]', space=smem, size = 0x4, offset = 0x4, fixed_abs, tag = 'smem constant byte address 0x4 - core index']
  #allocation1 [shape = 'u32[144,128]{1,0:T(1,128)}', space=vmem, size = 0x12000, scoped, tag = 'internal scratch']
  %s0 = inlined_call_operand.vmem [shape: f32[10,128], index: 0, kind: input, shape index: {}]
  %s1 = inlined_call_operand.hbm [shape: f32[10,10], index: 1, kind: input, shape index: {}]
  %s2 = inlined_call_operand.vmem [shape: f32[10,1], index: 2, kind: input, shape index: {}]
  %s3 = inlined_call_operand.vmem [shape: f32[5,10], index: 3, kind: input, shape index: {}]
  %s4 = inlined_call_operand.vmem [shape: f32[5,1], index: 4, kind: input, shape index: {}]
  %s5 = inlined_call_operand.hbm [shape: f32[5,128], index: 5, kind: output, shape index: {}]
  %s6 = sld [smem:[#allocation0]]
  $region34: #{tpu_custom_call.1} parent=0
    _
  %s8 = ssub.s32 1, %s6
  %s9 = scalar_select 0, %s8, %s6
  $region1: #{tpu_custom_call.1} parent=0
    #allocation2 [shape = 'u8[8192]{0}', space=vmem, size = 0x2000, scoped, tag = 'input window, operand 1, single buffered']
    #allocation3 [shape = 's32[1]{0}', space=sflag, size = 0x4, scoped, tag = 'scoped memory for tpu_custom_call.1']
    #allocation4 [shape = 's32[1]{0}', space=sflag, size = 0x4, scoped, tag = 'scoped memory for tpu_custom_call.1']
    #allocation5 [shape = 'u8[4096]{0}', space=vmem, size = 0x1000, scoped, tag = 'output window, operand 0, single buffered']
    %10 = vsyncpa [#allocation3], 0
    %11 = vsyncpa [#allocation4], 0
    // Predicated region
    $region2: #{tpu_custom_call.1} parent=1 // pred_check
      _
    $region3: #{tpu_custom_call.1} parent=1 // pred_check_branch
      %13 = sbr.rel (0) target = $region5
    $region4: #{tpu_custom_call.1} parent=1 // pred_region
      _
    $region5: #{tpu_custom_call.1} parent=1 // pred_fallthru
      _
    // Predicated region
    $region6: #{tpu_custom_call.1} parent=1 // pred_check
      _
    $region7: #{tpu_custom_call.1} parent=1 // pred_check_branch
      %15 = sbr.rel (0) target = $region9
    $region8: #{tpu_custom_call.1} parent=1 // pred_region
      %s17 = ssub.s32 256, 256
      %18 = vsyncadd [#allocation3], %s17
      %s19 = sshll.u32 [#allocation2], 4
      %s20 = int_to_ptr.vmem [resolvable:$true] %s19
      %25 = dma.hbm_to_vmem [thread:$0]  %s1, 256, %s20, [#allocation3], 128, 128, 8
    $region9: #{tpu_custom_call.1} parent=1 // pred_fallthru
      _
    // Predicated region
    $region10: #{tpu_custom_call.1} parent=1 // pred_check
      _
    $region11: #{tpu_custom_call.1} parent=1 // pred_check_branch
      %27 = sbr.rel (0) target = $region13
    $region12: #{tpu_custom_call.1} parent=1 // pred_region
      _
    $region13: #{tpu_custom_call.1} parent=1 // pred_fallthru
      _
    // Predicated region
    $region14: #{tpu_custom_call.1} parent=1 // pred_check
      _
    $region15: #{tpu_custom_call.1} parent=1 // pred_check_branch
      %29 = sbr.rel (0) target = $region17
    $region16: #{tpu_custom_call.1} parent=1 // pred_region
      _
    $region17: #{tpu_custom_call.1} parent=1 // pred_fallthru
      _
    // Predicated region
    $region18: #{tpu_custom_call.1} parent=1 // pred_check
      _
    $region19: #{tpu_custom_call.1} parent=1 // pred_check_branch
      %31 = sbr.rel (0) target = $region21
    $region20: #{tpu_custom_call.1} parent=1 // pred_region
      _
    $region21: #{tpu_custom_call.1} parent=1 // pred_fallthru
      _
    // Predicated region
    $region22: #{tpu_custom_call.1} parent=1 // pred_check
      _
    $region23: #{tpu_custom_call.1} parent=1 // pred_check_branch
      %33 = sbr.rel (0) target = $region25
    $region24: #{tpu_custom_call.1} parent=1 // pred_region
      %34 = dma.done [#allocation3], 256
    $region25: #{tpu_custom_call.1} parent=1 // pred_fallthru
      _
    %v35 = vld [vmem:[%s0] sm:$0xff]
    %v36 = vld [vmem:[%s0 + $0x8] sm:$0x3]
    %v37 = vld [vmem:[#allocation2] sm:$0xff]
    %v38 = vld [vmem:[#allocation2 + $0x8] sm:$0x3]
    %v39 = vld [vmem:[%s2] sm:$0xff]
    %v40 = vld [vmem:[%s2 + $0x8] sm:$0x3]
    %42 = vset.pattern.permute.xlu0 0
    %43 = vperm.xlu0 %42, %v39
    %v44 = vpop.permute.xlu0 %43
    %47 = vset.pattern.permute.xlu0 0
    %48 = vperm.xlu0 %47, %v40
    %v49 = vpop.permute.xlu0 %48
    %vm51 = vcmask 80896
    %v53 = vsel %vm51, %v37, 0
    %v56 = vsel %vm51, %v38, 0
    %vm58 = vcmask 1041408
    %v60 = vsel %vm58, %v36, 0
    %62 = vmatprep.subr.mxu0 0.0
    %63 = vmatpush1.msra.mxu0 %v35
    %64 = vmatprep.subr.mxu0 0.0
    %65 = vmatpush1.msra.mxu0 %v60
    %66 = vmatprep.subr.mxu0 0.0
    %67 = vmatpush1.msra.mxu0 0.0
    %68 = vmatprep.subr.mxu0 0.0
    %69 = vmatpush1.msra.mxu0 0.0
    %70 = vmatprep.subr.mxu0 0.0
    %71 = vmatpush1.msra.mxu0 0.0
    %72 = vmatprep.subr.mxu0 0.0
    %73 = vmatpush1.msra.mxu0 0.0
    %74 = vmatprep.subr.mxu0 0.0
    %75 = vmatpush1.msra.mxu0 0.0
    %76 = vmatprep.subr.mxu0 0.0
    %77 = vmatpush1.msra.mxu0 0.0
    %78 = vmatprep.subr.mxu0 0.0
    %79 = vmatpush1.msra.mxu0 0.0
    %80 = vmatprep.subr.mxu0 0.0
    %81 = vmatpush1.msra.mxu0 0.0
    %82 = vmatprep.subr.mxu0 0.0
    %83 = vmatpush1.msra.mxu0 0.0
    %84 = vmatprep.subr.mxu0 0.0
    %85 = vmatpush1.msra.mxu0 0.0
    %86 = vmatprep.subr.mxu0 0.0
    %87 = vmatpush1.msra.mxu0 0.0
    %88 = vmatprep.subr.mxu0 0.0
    %89 = vmatpush1.msra.mxu0 0.0
    %90 = vmatprep.subr.mxu0 0.0
    %91 = vmatpush1.msra.mxu0 0.0
    %92 = vmatprep.subr.mxu0 0.0
    %93 = vmatpush1.msra.mxu0 0.0
    %94 = vmatprep.subr.mxu0 0.0
    %95 = vmatpush1.msra.mxu0 0.0
    %96 = vmatprep.subr.mxu0 0.0
    %97 = vmatpush1.msra.mxu0 0.0
    %98 = vmatprep.subr.mxu0 0.0
    %99 = vmatpush1.msra.mxu0 0.0
    %100 = vmatprep.subr.mxu0 0.0
    %101 = vmatpush1.msra.mxu0 0.0
    %102 = vmatprep.subr.mxu0 0.0
    %103 = vmatpush1.msra.mxu0 0.0
    %104 = vmatprep.subr.mxu0 0.0
    %105 = vmatpush1.msra.mxu0 0.0
    %106 = vmatprep.subr.mxu0 0.0
    %107 = vmatpush1.msra.mxu0 0.0
    %108 = vmatprep.subr.mxu0 0.0
    %109 = vmatpush1.msra.mxu0 0.0
    %110 = vmatprep.subr.mxu0 0.0
    %111 = vmatpush1.msra.mxu0 0.0
    %112 = vmatprep.subr.mxu0 0.0
    %113 = vmatpush1.msra.mxu0 0.0
    %114 = vmatprep.subr.mxu0 0.0
    %115 = vmatpush1.msra.mxu0 0.0
    %116 = vmatprep.subr.mxu0 0.0
    %117 = vmatpush1.msra.mxu0 0.0
    %118 = vmatprep.subr.mxu0 0.0
    %119 = vmatpush1.msra.mxu0 0.0
    %120 = vmatprep.subr.mxu0 0.0
    %121 = vmatpush1.msra.mxu0 0.0
    %122 = vmatprep.subr.mxu0 0.0
    %123 = vmatpush1.msra.mxu0 0.0
    %124 = vmatprep.subr.mxu0 0.0
    %125 = vmatpush1.msra.mxu0 0.0
    %126 = vmatprep.mubr.f32.mxu0 0.0
    %127 = vmatmul.mubr.f32.gmra.mrb[0].mxu0 %v53
    %v128 = vpop.f32.mrb[0].mxu0
    %v129 = vadd.f32 %v44, %v128
    %v130 = vpop.f32.mrb[0].mxu0
    %131 = vmatprep.mubr.f32.mxu0 0.0
    %132 = vmatmul.mubr.f32.gmra.mrb[0].mxu0 %v56
    %v133 = vpop.f32.mrb[0].mxu0
    %v134 = vadd.f32 %v49, %v133
    %v135 = vpop.f32.mrb[0].mxu0
    %136 = vdwg.mxu0
    %v137 = vmax.f32 %v129, 0.0
    %v138 = vmax.f32 %v134, 0.0
    %v139 = vld [vmem:[%s3] sm:$0x1f]
    %v140 = vld [vmem:[%s4] sm:$0x1f]
    %142 = vset.pattern.permute.xlu0 0
    %143 = vperm.xlu0 %142, %v140
    %v144 = vpop.permute.xlu0 %143
    %v147 = vsel %vm51, %v139, 0
    %v150 = vsel %vm58, %v138, 0
    %152 = vmatprep.subr.mxu0 0.0
    %153 = vmatpush1.msra.mxu0 %v137
    %154 = vmatprep.subr.mxu0 0.0
    %155 = vmatpush1.msra.mxu0 %v150
    %156 = vmatprep.subr.mxu0 0.0
    %157 = vmatpush1.msra.mxu0 0.0
    %158 = vmatprep.subr.mxu0 0.0
    %159 = vmatpush1.msra.mxu0 0.0
    %160 = vmatprep.subr.mxu0 0.0
    %161 = vmatpush1.msra.mxu0 0.0
    %162 = vmatprep.subr.mxu0 0.0
    %163 = vmatpush1.msra.mxu0 0.0
    %164 = vmatprep.subr.mxu0 0.0
    %165 = vmatpush1.msra.mxu0 0.0
    %166 = vmatprep.subr.mxu0 0.0
    %167 = vmatpush1.msra.mxu0 0.0
    %168 = vmatprep.subr.mxu0 0.0
    %169 = vmatpush1.msra.mxu0 0.0
    %170 = vmatprep.subr.mxu0 0.0
    %171 = vmatpush1.msra.mxu0 0.0
    %172 = vmatprep.subr.mxu0 0.0
    %173 = vmatpush1.msra.mxu0 0.0
    %174 = vmatprep.subr.mxu0 0.0
    %175 = vmatpush1.msra.mxu0 0.0
    %176 = vmatprep.subr.mxu0 0.0
    %177 = vmatpush1.msra.mxu0 0.0
    %178 = vmatprep.subr.mxu0 0.0
    %179 = vmatpush1.msra.mxu0 0.0
    %180 = vmatprep.subr.mxu0 0.0
    %181 = vmatpush1.msra.mxu0 0.0
    %182 = vmatprep.subr.mxu0 0.0
    %183 = vmatpush1.msra.mxu0 0.0
    %184 = vmatprep.subr.mxu0 0.0
    %185 = vmatpush1.msra.mxu0 0.0
    %186 = vmatprep.subr.mxu0 0.0
    %187 = vmatpush1.msra.mxu0 0.0
    %188 = vmatprep.subr.mxu0 0.0
    %189 = vmatpush1.msra.mxu0 0.0
    %190 = vmatprep.subr.mxu0 0.0
    %191 = vmatpush1.msra.mxu0 0.0
    %192 = vmatprep.subr.mxu0 0.0
    %193 = vmatpush1.msra.mxu0 0.0
    %194 = vmatprep.subr.mxu0 0.0
    %195 = vmatpush1.msra.mxu0 0.0
    %196 = vmatprep.subr.mxu0 0.0
    %197 = vmatpush1.msra.mxu0 0.0
    %198 = vmatprep.subr.mxu0 0.0
    %199 = vmatpush1.msra.mxu0 0.0
    %200 = vmatprep.subr.mxu0 0.0
    %201 = vmatpush1.msra.mxu0 0.0
    %202 = vmatprep.subr.mxu0 0.0
    %203 = vmatpush1.msra.mxu0 0.0
    %204 = vmatprep.subr.mxu0 0.0
    %205 = vmatpush1.msra.mxu0 0.0
    %206 = vmatprep.subr.mxu0 0.0
    %207 = vmatpush1.msra.mxu0 0.0
    %208 = vmatprep.subr.mxu0 0.0
    %209 = vmatpush1.msra.mxu0 0.0
    %210 = vmatprep.subr.mxu0 0.0
    %211 = vmatpush1.msra.mxu0 0.0
    %212 = vmatprep.subr.mxu0 0.0
    %213 = vmatpush1.msra.mxu0 0.0
    %214 = vmatprep.subr.mxu0 0.0
    %215 = vmatpush1.msra.mxu0 0.0
    %216 = vmatprep.mubr.f32.mxu0 0.0
    %217 = vmatmul.mubr.f32.gmra.mrb[0].mxu0 %v147
    %v218 = vpop.f32.mrb[0].mxu0
    %v219 = vadd.f32 %v144, %v218
    %v220 = vpop.f32.mrb[0].mxu0
    %221 = vdwg.mxu0
    %222 = vst [vmem:[#allocation5] sm:$0x1f] %v219
    // Predicated region
    $region26: #{tpu_custom_call.1} parent=1 // pred_check
      _
    $region27: #{tpu_custom_call.1} parent=1 // pred_check_branch
      %224 = sbr.rel (0) target = $region29
    $region28: #{tpu_custom_call.1} parent=1 // pred_region
      %s226 = ssub.s32 128, 128
      %227 = vsyncadd [#allocation4], %s226
      %s229 = sshll.u32 [#allocation5], 4
      %s230 = int_to_ptr.vmem [resolvable:$true] %s229
      %232 = dma.vmem_to_hbm [thread:$0]  %s230, 128, %s5, [#allocation4]
    $region29: #{tpu_custom_call.1} parent=1 // pred_fallthru
      _
    // Predicated region
    $region30: #{tpu_custom_call.1} parent=1 // pred_check
      _
    $region31: #{tpu_custom_call.1} parent=1 // pred_check_branch
      %234 = sbr.rel (0) target = $region33
    $region32: #{tpu_custom_call.1} parent=1 // pred_region
      %235 = dma.done [#allocation4], 128
    $region33: #{tpu_custom_call.1} parent=1 // pred_fallthru
      _
    %236 = vsyncpa [#allocation3], 1
    %237 = vsyncpa [#allocation4], 1

</llo_original>
